<compile_context>
chip_gen: v7x
topology: tpu7x:2x2x1
jax: 0.10.0
libtpu: 0.0.40
codegen_flags: <defaults>
</compile_context>

<pallas_src>
import math

import jax
import jax.numpy as jnp
from jax.experimental import pallas as pl
from jax.experimental.pallas import tpu as pltpu

_LANE = 128
_VMEM_LIMIT_BYTES = 48 * 1024 * 1024  # explicit; > the 16/32 MiB default scoped limits


def _copy_kernel(x_ref, o_ref):
    # Pure tile copy: (TB, TF) VMEM block in -> same block out.
    o_ref[...] = x_ref[...]


def _sublane(itemsize: int) -> int:
    return {4: 8, 2: 16, 1: 32}.get(itemsize, 8)


def _slab_factorization(total: int, itemsize: int):
    """(rows, cols) view of `total` elements with cols % 128 == 0, rows % sublane == 0."""
    sub = _sublane(itemsize)
    if total % (_LANE * sub) != 0:
        return None
    # Prefer a wider lane dimension; any factorization is equivalent since each tile
    # spans the full width and is therefore a single contiguous span in memory.
    for k in (16, 8, 4, 2, 1):
        cols = _LANE * k
        if total % (cols * sub) == 0:
            return total // cols, cols
    return total // _LANE, _LANE  # unreachable: k == 1 always matches


def _copy_call(x2d: jax.Array, block, grid, dim_sem, itemsize: int) -> jax.Array:
    return pl.pallas_call(
        _copy_kernel,
        out_shape=jax.ShapeDtypeStruct(x2d.shape, x2d.dtype),
        grid_spec=pltpu.PrefetchScalarGridSpec(
            num_scalar_prefetch=0,
            grid=grid,
            in_specs=[pl.BlockSpec(block, (lambda i: (i, 0)) if len(grid) == 1
                                   else (lambda i, j: (i, j)))],
            out_specs=pl.BlockSpec(block, (lambda i: (i, 0)) if len(grid) == 1
                                   else (lambda i, j: (i, j))),
        ),
        input_output_aliases={0: 0},
        compiler_params=pltpu.CompilerParams(
            dimension_semantics=dim_sem,
            vmem_limit_bytes=_VMEM_LIMIT_BYTES,
        ),
        cost_estimate=pl.CostEstimate(
            flops=0,
            transcendentals=0,
            bytes_accessed=2 * x2d.size * itemsize,
        ),
    )(x2d)


def flatten_pallas(x: jax.Array, start_dim: int = 1, end_dim: int = -1,
                   *, tile_budget_bytes: int = 4 * 1024 * 1024) -> jax.Array:
    """Equivalent of torch.flatten(x, start_dim, end_dim)."""
    ndim = x.ndim
    sd = start_dim % ndim
    ed = end_dim % ndim
    assert sd <= ed, "start_dim must not be after end_dim"
    out_shape = x.shape[:sd] + (math.prod(x.shape[sd:ed + 1]),) + x.shape[ed + 1:]

    total = x.size
    itemsize = jnp.dtype(x.dtype).itemsize
    sub = _sublane(itemsize)
    budget = max(tile_budget_bytes, sub * _LANE * itemsize)

    slab = _slab_factorization(total, itemsize)
    if slab is not None:
        # Lane/sublane-dense slab: every tile is an unmasked, contiguous DMA.
        rows, cols = slab
        x2d = x.reshape(rows, cols)  # free metadata reshape (contiguous input)
        tb = max(sub, (budget // (cols * itemsize)) // sub * sub)
        tb = min(tb, rows)
        # Split into >= 2 blocks when possible so v7x's 2 TensorCores both get work.
        if tb >= rows and rows >= 2 * sub:
            tb = ((rows // 2 + sub - 1) // sub) * sub
        grid = (pl.cdiv(rows, tb),)
        out = _copy_call(x2d, (tb, cols), grid, ("parallel",), itemsize)
        return out.reshape(out_shape)

    # Fallback: 2-D (lead, rest) tiling, clamped to the budget so double-buffered
    # in+out always fits the scoped-VMEM limit.  Ragged edges are masked by Pallas.
    lead = out_shape[0] if len(out_shape) >= 2 else 1
    rest = total // lead
    x2d = x.reshape(lead, rest)
    tf = max(_LANE, (budget // (sub * itemsize)) // _LANE * _LANE)
    tf = min(tf, rest)
    tb = max(sub, (budget // (tf * itemsize)) // sub * sub)
    tb = min(tb, lead)
    grid = (pl.cdiv(lead, tb), pl.cdiv(rest, tf))
    out = _copy_call(x2d, (tb, tf), grid, ("parallel", "parallel"), itemsize)
    return out.reshape(out_shape)


if __name__ == "__main__":
    key = jax.random.PRNGKey(0)
    # Small shapes consistent with a conv feature map: batch=2, channels=4, spatial=16.
    x = jax.random.normal(key, (2, 4, 16, 16), dtype=jnp.float32)

    ref = x.reshape(x.shape[0], -1)  # identical to torch.flatten(x, 1, -1)

    out = flatten_pallas(x)
    out = jax.block_until_ready(out)

    assert out.shape == (2, 4 * 16 * 16)
    assert out.dtype == x.dtype
    assert jnp.array_equal(out, ref)

    print("KERNEL_OK")
</pallas_src>

<mosaic_0001>
module attributes {stable_mosaic.version = 11 : i64} {
  func.func @_copy_kernel(%arg0: i32, %arg1: memref<8x256xf32, #tpu.memory_space<vmem>>, %arg2: memref<8x256xf32, #tpu.memory_space<vmem>>) attributes {dimension_semantics = [#tpu.dimension_semantics<parallel>], iteration_bounds = array<i64: 1>, scalar_prefetch = 0 : i64, scratch_operands = 0 : i64, tpu.core_type = #tpu.core_type<tc>, window_params = [{transform_indices = @transform_0, window_bounds = array<i64: 8, 256>}, {transform_indices = @transform_1, window_bounds = array<i64: 8, 256>}]} {
    %c0 = arith.constant 0 : index
    %c0_0 = arith.constant 0 : index
    %0 = vector.load %arg1[%c0, %c0_0] : memref<8x256xf32, #tpu.memory_space<vmem>>, vector<8x256xf32>
    %c0_1 = arith.constant 0 : index
    %c0_2 = arith.constant 0 : index
    %1 = vector.load %arg2[%c0_1, %c0_2] : memref<8x256xf32, #tpu.memory_space<vmem>>, vector<8x256xf32>
    tpu.vector_store %arg2[%c0_1, %c0_2], %0 {strides = array<i32>} : memref<8x256xf32, #tpu.memory_space<vmem>>, vector<8x256xf32>,
    return
  }
  func.func @transform_0(%arg0: i32) -> (i32, i32) {
    %c0_i32 = arith.constant 0 : i32
    %c0_i32_0 = arith.constant 0 : i32
    return %arg0, %c0_i32 : i32, i32
  }
  func.func @transform_1(%arg0: i32) -> (i32, i32) {
    %c0_i32 = arith.constant 0 : i32
    %c0_i32_0 = arith.constant 0 : i32
    return %arg0, %c0_i32 : i32, i32
  }
}

</mosaic_0001>

<llo_original>
// kernel: tpu_custom_call.1
$region0: #{tpu_custom_call.1}
  #allocation0 [shape = 'u32[]', space=smem, size = 0x4, offset = 0x4, fixed_abs, tag = 'smem constant byte address 0x4 - core index']
  #allocation1 [shape = 'u32[144,128]{1,0:T(1,128)}', space=vmem, size = 0x12000, scoped, tag = 'internal scratch']
  %s0 = inlined_call_operand.hbm [shape: f32[8,256], index: 0, kind: input, shape index: {}, may-alias: {0,1}]
  %s1 = inlined_call_operand.hbm [shape: f32[8,256], index: 1, kind: output, shape index: {}, may-alias: {0,1}]
  %s2 = sld [smem:[#allocation0]]
  $region18: #{tpu_custom_call.1} parent=0
    _
  %s4 = ssub.s32 1, %s2
  %s5 = scalar_select 0, %s4, %s2
  $region1: #{tpu_custom_call.1} parent=0
    #allocation2 [shape = 'u8[8192]{0}', space=vmem, size = 0x2000, scoped, tag = 'input window, operand 0, single buffered']
    #allocation3 [shape = 's32[1]{0}', space=sflag, size = 0x4, scoped, tag = 'scoped memory for tpu_custom_call.1']
    #allocation4 [shape = 's32[1]{0}', space=sflag, size = 0x4, scoped, tag = 'scoped memory for tpu_custom_call.1']
    #allocation5 [shape = 'u8[8192]{0}', space=vmem, size = 0x2000, scoped, tag = 'output window, operand 0, single buffered']
    %6 = vsyncpa [#allocation3], 0
    %7 = vsyncpa [#allocation4], 0
    // Predicated region
    $region2: #{tpu_custom_call.1} parent=1 // pred_check
      _
    $region3: #{tpu_custom_call.1} parent=1 // pred_check_branch
      %9 = sbr.rel (0) target = $region5
    $region4: #{tpu_custom_call.1} parent=1 // pred_region
      %s11 = ssub.s32 256, 256
      %12 = vsyncadd [#allocation3], %s11
      %s14 = sshll.u32 [#allocation2], 4
      %s15 = int_to_ptr.vmem [resolvable:$true] %s14
      %17 = dma.hbm_to_vmem [thread:$0]  %s0, 256, %s15, [#allocation3]
    $region5: #{tpu_custom_call.1} parent=1 // pred_fallthru
      _
    // Predicated region
    $region6: #{tpu_custom_call.1} parent=1 // pred_check
      _
    $region7: #{tpu_custom_call.1} parent=1 // pred_check_branch
      %19 = sbr.rel (0) target = $region9
    $region8: #{tpu_custom_call.1} parent=1 // pred_region
      %20 = dma.done [#allocation3], 256
    $region9: #{tpu_custom_call.1} parent=1 // pred_fallthru
      _
    %v21 = vld [vmem:[#allocation2] sm:$0xff]
    %v22 = vld [vmem:[#allocation2 + $0x8] sm:$0xff]
    %23 = vst [vmem:[#allocation5] sm:$0xff] %v21
    %24 = vst [vmem:[#allocation5 + $0x8] sm:$0xff] %v22
    // Predicated region
    $region10: #{tpu_custom_call.1} parent=1 // pred_check
      _
    $region11: #{tpu_custom_call.1} parent=1 // pred_check_branch
      %26 = sbr.rel (0) target = $region13
    $region12: #{tpu_custom_call.1} parent=1 // pred_region
      %s28 = ssub.s32 256, 256
      %29 = vsyncadd [#allocation4], %s28
      %s31 = sshll.u32 [#allocation5], 4
      %s32 = int_to_ptr.vmem [resolvable:$true] %s31
      %34 = dma.vmem_to_hbm [thread:$0]  %s32, 256, %s1, [#allocation4]
    $region13: #{tpu_custom_call.1} parent=1 // pred_fallthru
      _
    // Predicated region
    $region14: #{tpu_custom_call.1} parent=1 // pred_check
      _
    $region15: #{tpu_custom_call.1} parent=1 // pred_check_branch
      %36 = sbr.rel (0) target = $region17
    $region16: #{tpu_custom_call.1} parent=1 // pred_region
      %37 = dma.done [#allocation4], 256
    $region17: #{tpu_custom_call.1} parent=1 // pred_fallthru
      _
    %38 = vsyncpa [#allocation3], 1
    %39 = vsyncpa [#allocation4], 1

</llo_original>
